<compile_context>
chip_gen: v6e
topology: v6e:2x2x1
jax: 0.10.0
libtpu: 0.0.40
codegen_flags: <defaults>
</compile_context>

<pallas_src>
import functools

import numpy as np
import jax
import jax.numpy as jnp
from jax import lax
from jax.experimental import pallas as pl
from jax.experimental.pallas import tpu as pltpu

ATTEN_SIZE = 2  # the PyTorch module reads a global `atten_size`; fixed here


def create_positional_encoding(seq_len, hidden_size):
    # Exact replica of the module's numpy code (note: columns indexed by seq_len).
    pos_enc = np.array(
        [[pos / np.power(10000, 2 * (j // 2) / hidden_size) for j in range(seq_len)]
         for pos in range(seq_len)]
    )
    pos_enc[:, 0::2] = np.sin(pos_enc[:, 0::2])
    pos_enc[:, 1::2] = np.cos(pos_enc[:, 1::2])
    return jnp.asarray(pos_enc, dtype=jnp.float32)


def _attn_kernel(atten_size, seq_len,
                 x_ref, pos_ref, w1_ref, b1_ref, wq_ref, wk_ref, wv_ref,
                 wo_ref, bo_ref, out_ref, attn_ref):
    a = atten_size
    win = 2 * a + 1
    S = seq_len
    BB = x_ref.shape[0]
    Din = x_ref.shape[2]
    M = BB * S
    H = wq_ref.shape[0]
    f32 = jnp.float32
    bf16 = jnp.bfloat16

    # positional encoding (broadcast over the BB batch rows of this block)
    x = x_ref[...] + pos_ref[...][None, :, :]            # (BB, S, Din) f32
    x2 = x.reshape(M, Din)                               # fold batch into matmul M

    # layer1 + ReLU: bf16 MXU operands, f32 accumulation, f32 elementwise
    h = jnp.dot(x2.astype(bf16), w1_ref[...],
                preferred_element_type=f32) + b1_ref[...]
    h = jnp.maximum(h, 0.0)                              # (M, H) f32

    hb = h.astype(bf16)
    q = jnp.dot(hb, wq_ref[...], preferred_element_type=f32)   # (M, H) f32
    k = jnp.dot(hb, wk_ref[...], preferred_element_type=f32)
    v = jnp.dot(hb, wv_ref[...], preferred_element_type=f32)

    inv_sqrt = np.float32(1.0 / np.sqrt(float(H)))

    # sequence index of every flattened row; used to mask window positions that fall
    # outside a batch row's own sequence (those keys/values are zero in the reference)
    row_i = lax.broadcasted_iota(jnp.int32, (BB, S, 1), 1).reshape(M, 1)

    # per-window-offset score columns, kept as separate (M, 1) columns
    score_cols = []
    v_shift = []
    masks = []
    for j in range(win):                                  # static unrolled loop (win small)
        d = a - j                                         # neighbour offset along the sequence
        shift = (-d) % M                                  # roll so row r sees row r + d
        if shift:
            k_d = pltpu.roll(k, shift=shift, axis=0)
            v_d = pltpu.roll(v, shift=shift, axis=0)
        else:
            k_d, v_d = k, v
        valid = jnp.logical_and(row_i + d >= 0, row_i + d < S)   # (M, 1) bool
        s_j = jnp.sum(q * k_d, axis=-1, keepdims=True) * inv_sqrt
        # zero keys (outside the sequence) give score 0 but still join the softmax
        score_cols.append(jnp.where(valid, s_j, 0.0))
        v_shift.append(v_d)
        masks.append(valid)

    # column-wise softmax (no lane-sparse (M, win) intermediate)
    m = score_cols[0]
    for c in score_cols[1:]:
        m = jnp.maximum(m, c)
    e_cols = [jnp.exp(c - m) for c in score_cols]
    denom = e_cols[0]
    for e in e_cols[1:]:
        denom = denom + e
    inv_denom = pl.reciprocal(denom, approx=True)
    attn_cols = [e * inv_denom for e in e_cols]

    # context: out-of-range neighbours contribute zero values (mask the rolled v)
    ctx = jnp.zeros((M, H), f32)
    for j in range(win):
        w_j = jnp.where(masks[j], attn_cols[j], 0.0)      # (M, 1)
        ctx = ctx + w_j * v_shift[j]
    ctx = ctx * inv_sqrt

    out = jnp.dot(ctx.astype(bf16), wo_ref[...],
                  preferred_element_type=f32) + bo_ref[...]
    out_ref[...] = out                                    # lane-dense (M, OUT_PAD) store

    # single concatenate at the end; padded to a lane-dense width
    pad_cols = attn_ref.shape[-1] - win
    cols = list(attn_cols)
    if pad_cols:
        cols.append(jnp.zeros((M, pad_cols), f32))
    attn_ref[...] = jnp.concatenate(cols, axis=-1)


def rest_self_atten(x, params, atten_size):
    """x: [B, S, Din] float32, params = (w1, b1, wq, wk, wv, wo, bo) (all float32)."""
    w1, b1, wq, wk, wv, wo, bo = params
    B, S, Din = x.shape
    H = w1.shape[1]
    Dout = wo.shape[1]
    win = 2 * atten_size + 1
    assert Din == S, "module semantics require input_size == seq_len (pos-enc add)"

    # fold several batch rows into one block so every matmul sees M = BB*S rows
    BB = min(B, max(1, 512 // max(S, 1)))
    # keep the flattened block row count sublane-aligned when there are multiple blocks
    while BB < B and (BB * S) % 8 != 0:
        BB += 1
    G = pl.cdiv(B, BB)
    B_pad = G * BB
    if B_pad != B:
        x = jnp.pad(x, ((0, B_pad - B), (0, 0), (0, 0)))

    # lane-dense output widths (sliced back after the call)
    OUT_PAD = ((Dout + 127) // 128) * 128
    ATTN_PAD = ((win + 127) // 128) * 128

    # weights as bf16 MXU operands (halves weight DMA traffic too); biases stay f32
    bf16 = jnp.bfloat16
    w1_b = w1.astype(bf16)
    wq_b = wq.astype(bf16)
    wk_b = wk.astype(bf16)
    wv_b = wv.astype(bf16)
    wo_b = jnp.pad(wo, ((0, 0), (0, OUT_PAD - Dout))).astype(bf16)
    bo_p = jnp.pad(bo, ((0, 0), (0, OUT_PAD - Dout)))

    # TODO(synk): pos is O(S^2) f32; for very large S it should be tiled over the grid
    # (or generated in-kernel) instead of kept fully resident in VMEM.
    pos = create_positional_encoding(S, H)                # (S, S) == (S, Din)

    kernel = functools.partial(_attn_kernel, atten_size, S)

    def rep_spec(shape):
        return pl.BlockSpec(shape, lambda g: (0,) * len(shape))

    out_flat, attn_flat = pl.pallas_call(
        kernel,
        out_shape=(jax.ShapeDtypeStruct((B_pad * S, OUT_PAD), jnp.float32),
                   jax.ShapeDtypeStruct((B_pad * S, ATTN_PAD), jnp.float32)),
        grid=(G,),
        in_specs=[
            pl.BlockSpec((BB, S, Din), lambda g: (g, 0, 0)),   # x  (BB batch rows / step)
            rep_spec((S, Din)),                                # pos_enc
            rep_spec(w1_b.shape), rep_spec(b1.shape),          # layer1
            rep_spec(wq_b.shape), rep_spec(wk_b.shape), rep_spec(wv_b.shape),
            rep_spec(wo_b.shape), rep_spec(bo_p.shape),        # output layer (padded)
        ],
        out_specs=(pl.BlockSpec((BB * S, OUT_PAD), lambda g: (g, 0)),
                   pl.BlockSpec((BB * S, ATTN_PAD), lambda g: (g, 0))),
        compiler_params=pltpu.CompilerParams(
            dimension_semantics=("parallel",),
            vmem_limit_bytes=32 * 1024 * 1024),
    )(x, pos, w1_b, b1, wq_b, wk_b, wv_b, wo_b, bo_p)

    out = out_flat.reshape(B_pad, S, OUT_PAD)[:B, :, :Dout]
    attn = attn_flat.reshape(B_pad, S, ATTN_PAD)[:B, :, :win]
    return out, attn


def reference(x, params, atten_size):
    """Pure-JAX reference with identical semantics, for a sanity check."""
    w1, b1, wq, wk, wv, wo, bo = params
    B, S, Din = x.shape
    H = w1.shape[1]
    a = atten_size
    pos = create_positional_encoding(S, H)
    x = x + pos[None]
    h = jnp.maximum(x @ w1 + b1, 0.0)
    q, k, v = h @ wq, h @ wk, h @ wv
    kp = jnp.pad(k, ((0, 0), (a, a), (0, 0)))
    vp = jnp.pad(v, ((0, 0), (a, a), (0, 0)))
    inv_sqrt = 1.0 / np.sqrt(float(H))
    cols_k = [kp[:, 2 * a - j:2 * a - j + S] for j in range(2 * a + 1)]
    scores = jnp.stack([jnp.sum(q * c, -1) for c in cols_k], -1) * inv_sqrt
    attn = jax.nn.softmax(scores, -1)
    cols_v = [vp[:, 2 * a - j:2 * a - j + S] for j in range(2 * a + 1)]
    ctx = sum(attn[..., j:j + 1] * cols_v[j] for j in range(2 * a + 1)) * inv_sqrt
    out = ctx @ wo + bo
    return out, attn


if __name__ == "__main__":
    # Small shapes consistent with the forward pass.
    # NOTE: input_size must equal seq_len for the pos-enc addition to broadcast,
    # exactly as in the PyTorch module.
    B, S = 2, 8
    input_size = S
    hidden_size = 32
    output_size = 16

    key = jax.random.PRNGKey(0)
    ks = jax.random.split(key, 8)
    x = jax.random.normal(ks[0], (B, S, input_size), dtype=jnp.float32)

    scale = 0.1
    w1 = scale * jax.random.normal(ks[1], (input_size, hidden_size), dtype=jnp.float32)
    b1 = scale * jax.random.normal(ks[2], (1, hidden_size), dtype=jnp.float32)
    wq = scale * jax.random.normal(ks[3], (hidden_size, hidden_size), dtype=jnp.float32)
    wk = scale * jax.random.normal(ks[4], (hidden_size, hidden_size), dtype=jnp.float32)
    wv = scale * jax.random.normal(ks[5], (hidden_size, hidden_size), dtype=jnp.float32)
    wo = scale * jax.random.normal(ks[6], (hidden_size, output_size), dtype=jnp.float32)
    bo = scale * jax.random.normal(ks[7], (1, output_size), dtype=jnp.float32)
    params = (w1, b1, wq, wk, wv, wo, bo)

    out, attn = rest_self_atten(x, params, ATTEN_SIZE)
    out = jax.block_until_ready(out)
    attn = jax.block_until_ready(attn)

    ref_out, ref_attn = reference(x, params, ATTEN_SIZE)
    np.testing.assert_allclose(np.asarray(out), np.asarray(ref_out), rtol=2e-2, atol=2e-2)
    np.testing.assert_allclose(np.asarray(attn), np.asarray(ref_attn), rtol=2e-2, atol=2e-2)

    assert out.shape == (B, S, output_size)
    assert attn.shape == (B, S, 2 * ATTEN_SIZE + 1)
    print("KERNEL_OK")
</pallas_src>

<mosaic_0001>
module attributes {stable_mosaic.version = 11 : i64} {
  func.func @_attn_kernel(%arg0: i32, %arg1: memref<2x8x8xf32, #tpu.memory_space<vmem>>, %arg2: memref<8x8xf32, #tpu.memory_space<vmem>>, %arg3: memref<8x32xbf16, #tpu.memory_space<vmem>>, %arg4: memref<1x32xf32, #tpu.memory_space<vmem>>, %arg5: memref<32x32xbf16, #tpu.memory_space<vmem>>, %arg6: memref<32x32xbf16, #tpu.memory_space<vmem>>, %arg7: memref<32x32xbf16, #tpu.memory_space<vmem>>, %arg8: memref<32x128xbf16, #tpu.memory_space<vmem>>, %arg9: memref<1x128xf32, #tpu.memory_space<vmem>>, %arg10: memref<16x128xf32, #tpu.memory_space<vmem>>, %arg11: memref<16x128xf32, #tpu.memory_space<vmem>>) attributes {dimension_semantics = [#tpu.dimension_semantics<parallel>], iteration_bounds = array<i64: 1>, scalar_prefetch = 0 : i64, scratch_operands = 0 : i64, tpu.core_type = #tpu.core_type<tc>, window_params = [{transform_indices = @transform_0, window_bounds = array<i64: 2, 8, 8>}, {pipeline_mode = #tpu.pipeline_mode<synchronous>, transform_indices = @transform_1, window_bounds = array<i64: 8, 8>}, {pipeline_mode = #tpu.pipeline_mode<synchronous>, transform_indices = @transform_2, window_bounds = array<i64: 8, 32>}, {pipeline_mode = #tpu.pipeline_mode<synchronous>, transform_indices = @transform_3, window_bounds = array<i64: 1, 32>}, {pipeline_mode = #tpu.pipeline_mode<synchronous>, transform_indices = @transform_4, window_bounds = array<i64: 32, 32>}, {pipeline_mode = #tpu.pipeline_mode<synchronous>, transform_indices = @transform_5, window_bounds = array<i64: 32, 32>}, {pipeline_mode = #tpu.pipeline_mode<synchronous>, transform_indices = @transform_6, window_bounds = array<i64: 32, 32>}, {pipeline_mode = #tpu.pipeline_mode<synchronous>, transform_indices = @transform_7, window_bounds = array<i64: 32, 128>}, {pipeline_mode = #tpu.pipeline_mode<synchronous>, transform_indices = @transform_8, window_bounds = array<i64: 1, 128>}, {transform_indices = @transform_9, window_bounds = array<i64: 16, 128>}, {transform_indices = @transform_10, window_bounds = array<i64: 16, 128>}]} {
    %c0 = arith.constant 0 : index
    %c0_0 = arith.constant 0 : index
    %c0_1 = arith.constant 0 : index
    %0 = vector.load %arg1[%c0, %c0_0, %c0_1] : memref<2x8x8xf32, #tpu.memory_space<vmem>>, vector<2x8x8xf32>
    %c0_2 = arith.constant 0 : index
    %c0_3 = arith.constant 0 : index
    %1 = vector.load %arg2[%c0_2, %c0_3] : memref<8x8xf32, #tpu.memory_space<vmem>>, vector<8x8xf32>
    %2 = vector.shape_cast %1 : vector<8x8xf32> to vector<1x8x8xf32>
    %3 = vector.broadcast %2 : vector<1x8x8xf32> to vector<2x8x8xf32>
    %4 = arith.addf %0, %3 : vector<2x8x8xf32>
    %5 = vector.shape_cast %4 : vector<2x8x8xf32> to vector<16x8xf32>
    %6 = arith.truncf %5 : vector<16x8xf32> to vector<16x8xbf16>
    %c0_4 = arith.constant 0 : index
    %c0_5 = arith.constant 0 : index
    %7 = vector.load %arg3[%c0_4, %c0_5] : memref<8x32xbf16, #tpu.memory_space<vmem>>, vector<8x32xbf16>
    %cst = arith.constant dense<0.000000e+00> : vector<16x32xf32>
    %8 = tpu.matmul %6, %7, %cst {dimension_numbers = #tpu.dot_dimension_numbers<[1], [0], [0], [1], [0, 0, 1, 1], [], []>} : vector<16x8xbf16>, vector<8x32xbf16>, vector<16x32xf32> -> vector<16x32xf32>
    %c0_6 = arith.constant 0 : index
    %c0_7 = arith.constant 0 : index
    %9 = vector.load %arg4[%c0_6, %c0_7] : memref<1x32xf32, #tpu.memory_space<vmem>>, vector<1x32xf32>
    %10 = vector.broadcast %9 : vector<1x32xf32> to vector<16x32xf32>
    %11 = arith.addf %8, %10 : vector<16x32xf32>
    %cst_8 = arith.constant 0.000000e+00 : f32
    %12 = vector.broadcast %cst_8 : f32 to vector<16x32xf32>
    %13 = arith.maximumf %11, %12 : vector<16x32xf32>
    %14 = arith.truncf %13 : vector<16x32xf32> to vector<16x32xbf16>
    %c0_9 = arith.constant 0 : index
    %c0_10 = arith.constant 0 : index
    %15 = vector.load %arg5[%c0_9, %c0_10] : memref<32x32xbf16, #tpu.memory_space<vmem>>, vector<32x32xbf16>
    %cst_11 = arith.constant dense<0.000000e+00> : vector<16x32xf32>
    %16 = tpu.matmul %14, %15, %cst_11 {dimension_numbers = #tpu.dot_dimension_numbers<[1], [0], [0], [1], [0, 0, 1, 1], [], []>} : vector<16x32xbf16>, vector<32x32xbf16>, vector<16x32xf32> -> vector<16x32xf32>
    %c0_12 = arith.constant 0 : index
    %c0_13 = arith.constant 0 : index
    %17 = vector.load %arg6[%c0_12, %c0_13] : memref<32x32xbf16, #tpu.memory_space<vmem>>, vector<32x32xbf16>
    %cst_14 = arith.constant dense<0.000000e+00> : vector<16x32xf32>
    %18 = tpu.matmul %14, %17, %cst_14 {dimension_numbers = #tpu.dot_dimension_numbers<[1], [0], [0], [1], [0, 0, 1, 1], [], []>} : vector<16x32xbf16>, vector<32x32xbf16>, vector<16x32xf32> -> vector<16x32xf32>
    %c0_15 = arith.constant 0 : index
    %c0_16 = arith.constant 0 : index
    %19 = vector.load %arg7[%c0_15, %c0_16] : memref<32x32xbf16, #tpu.memory_space<vmem>>, vector<32x32xbf16>
    %cst_17 = arith.constant dense<0.000000e+00> : vector<16x32xf32>
    %20 = tpu.matmul %14, %19, %cst_17 {dimension_numbers = #tpu.dot_dimension_numbers<[1], [0], [0], [1], [0, 0, 1, 1], [], []>} : vector<16x32xbf16>, vector<32x32xbf16>, vector<16x32xf32> -> vector<16x32xf32>
    %21 = tpu.iota {dimensions = array<i32: 1>} : vector<2x8x1xi32>
    %22 = vector.shape_cast %21 : vector<2x8x1xi32> to vector<16x1xi32>
    %c14_i32 = arith.constant 14 : i32
    %23 = tpu.dynamic_rotate %18 by %c14_i32 dim 0 : vector<16x32xf32>, i32 -> vector<16x32xf32>
    %c14_i32_18 = arith.constant 14 : i32
    %24 = tpu.dynamic_rotate %20 by %c14_i32_18 dim 0 : vector<16x32xf32>, i32 -> vector<16x32xf32>
    %c2_i32 = arith.constant 2 : i32
    %25 = vector.broadcast %c2_i32 : i32 to vector<16x1xi32>
    %26 = arith.addi %22, %25 : vector<16x1xi32>
    %c0_i32 = arith.constant 0 : i32
    %27 = vector.broadcast %c0_i32 : i32 to vector<16x1xi32>
    %28 = arith.cmpi sge, %26, %27 : vector<16x1xi32>
    %c2_i32_19 = arith.constant 2 : i32
    %29 = vector.broadcast %c2_i32_19 : i32 to vector<16x1xi32>
    %30 = arith.addi %22, %29 : vector<16x1xi32>
    %c8_i32 = arith.constant 8 : i32
    %31 = vector.broadcast %c8_i32 : i32 to vector<16x1xi32>
    %32 = arith.cmpi slt, %30, %31 : vector<16x1xi32>
    %33 = arith.andi %28, %32 : vector<16x1xi1>
    %34 = arith.mulf %16, %23 : vector<16x32xf32>
    %cst_20 = arith.constant dense<0.000000e+00> : vector<16xf32>
    %35 = vector.multi_reduction <add>, %34, %cst_20 [1] : vector<16x32xf32> to vector<16xf32>
    %36 = vector.shape_cast %35 : vector<16xf32> to vector<16x1xf32>
    %cst_21 = arith.constant 0.176776692 : f32
    %37 = vector.broadcast %cst_21 : f32 to vector<16x1xf32>
    %38 = arith.mulf %36, %37 : vector<16x1xf32>
    %cst_22 = arith.constant 0.000000e+00 : f32
    %39 = vector.broadcast %cst_22 : f32 to vector<16x1xf32>
    %40 = arith.select %33, %38, %39 : vector<16x1xi1>, vector<16x1xf32>
    %c15_i32 = arith.constant 15 : i32
    %41 = tpu.dynamic_rotate %18 by %c15_i32 dim 0 : vector<16x32xf32>, i32 -> vector<16x32xf32>
    %c15_i32_23 = arith.constant 15 : i32
    %42 = tpu.dynamic_rotate %20 by %c15_i32_23 dim 0 : vector<16x32xf32>, i32 -> vector<16x32xf32>
    %c1_i32 = arith.constant 1 : i32
    %43 = vector.broadcast %c1_i32 : i32 to vector<16x1xi32>
    %44 = arith.addi %22, %43 : vector<16x1xi32>
    %c0_i32_24 = arith.constant 0 : i32
    %45 = vector.broadcast %c0_i32_24 : i32 to vector<16x1xi32>
    %46 = arith.cmpi sge, %44, %45 : vector<16x1xi32>
    %c1_i32_25 = arith.constant 1 : i32
    %47 = vector.broadcast %c1_i32_25 : i32 to vector<16x1xi32>
    %48 = arith.addi %22, %47 : vector<16x1xi32>
    %c8_i32_26 = arith.constant 8 : i32
    %49 = vector.broadcast %c8_i32_26 : i32 to vector<16x1xi32>
    %50 = arith.cmpi slt, %48, %49 : vector<16x1xi32>
    %51 = arith.andi %46, %50 : vector<16x1xi1>
    %52 = arith.mulf %16, %41 : vector<16x32xf32>
    %cst_27 = arith.constant dense<0.000000e+00> : vector<16xf32>
    %53 = vector.multi_reduction <add>, %52, %cst_27 [1] : vector<16x32xf32> to vector<16xf32>
    %54 = vector.shape_cast %53 : vector<16xf32> to vector<16x1xf32>
    %cst_28 = arith.constant 0.176776692 : f32
    %55 = vector.broadcast %cst_28 : f32 to vector<16x1xf32>
    %56 = arith.mulf %54, %55 : vector<16x1xf32>
    %cst_29 = arith.constant 0.000000e+00 : f32
    %57 = vector.broadcast %cst_29 : f32 to vector<16x1xf32>
    %58 = arith.select %51, %56, %57 : vector<16x1xi1>, vector<16x1xf32>
    %c0_i32_30 = arith.constant 0 : i32
    %59 = vector.broadcast %c0_i32_30 : i32 to vector<16x1xi32>
    %60 = arith.addi %22, %59 : vector<16x1xi32>
    %c0_i32_31 = arith.constant 0 : i32
    %61 = vector.broadcast %c0_i32_31 : i32 to vector<16x1xi32>
    %62 = arith.cmpi sge, %60, %61 : vector<16x1xi32>
    %c0_i32_32 = arith.constant 0 : i32
    %63 = vector.broadcast %c0_i32_32 : i32 to vector<16x1xi32>
    %64 = arith.addi %22, %63 : vector<16x1xi32>
    %c8_i32_33 = arith.constant 8 : i32
    %65 = vector.broadcast %c8_i32_33 : i32 to vector<16x1xi32>
    %66 = arith.cmpi slt, %64, %65 : vector<16x1xi32>
    %67 = arith.andi %62, %66 : vector<16x1xi1>
    %68 = arith.mulf %16, %18 : vector<16x32xf32>
    %cst_34 = arith.constant dense<0.000000e+00> : vector<16xf32>
    %69 = vector.multi_reduction <add>, %68, %cst_34 [1] : vector<16x32xf32> to vector<16xf32>
    %70 = vector.shape_cast %69 : vector<16xf32> to vector<16x1xf32>
    %cst_35 = arith.constant 0.176776692 : f32
    %71 = vector.broadcast %cst_35 : f32 to vector<16x1xf32>
    %72 = arith.mulf %70, %71 : vector<16x1xf32>
    %cst_36 = arith.constant 0.000000e+00 : f32
    %73 = vector.broadcast %cst_36 : f32 to vector<16x1xf32>
    %74 = arith.select %67, %72, %73 : vector<16x1xi1>, vector<16x1xf32>
    %c1_i32_37 = arith.constant 1 : i32
    %75 = tpu.dynamic_rotate %18 by %c1_i32_37 dim 0 : vector<16x32xf32>, i32 -> vector<16x32xf32>
    %c1_i32_38 = arith.constant 1 : i32
    %76 = tpu.dynamic_rotate %20 by %c1_i32_38 dim 0 : vector<16x32xf32>, i32 -> vector<16x32xf32>
    %c-1_i32 = arith.constant -1 : i32
    %77 = vector.broadcast %c-1_i32 : i32 to vector<16x1xi32>
    %78 = arith.addi %22, %77 : vector<16x1xi32>
    %c0_i32_39 = arith.constant 0 : i32
    %79 = vector.broadcast %c0_i32_39 : i32 to vector<16x1xi32>
    %80 = arith.cmpi sge, %78, %79 : vector<16x1xi32>
    %c-1_i32_40 = arith.constant -1 : i32
    %81 = vector.broadcast %c-1_i32_40 : i32 to vector<16x1xi32>
    %82 = arith.addi %22, %81 : vector<16x1xi32>
    %c8_i32_41 = arith.constant 8 : i32
    %83 = vector.broadcast %c8_i32_41 : i32 to vector<16x1xi32>
    %84 = arith.cmpi slt, %82, %83 : vector<16x1xi32>
    %85 = arith.andi %80, %84 : vector<16x1xi1>
    %86 = arith.mulf %16, %75 : vector<16x32xf32>
    %cst_42 = arith.constant dense<0.000000e+00> : vector<16xf32>
    %87 = vector.multi_reduction <add>, %86, %cst_42 [1] : vector<16x32xf32> to vector<16xf32>
    %88 = vector.shape_cast %87 : vector<16xf32> to vector<16x1xf32>
    %cst_43 = arith.constant 0.176776692 : f32
    %89 = vector.broadcast %cst_43 : f32 to vector<16x1xf32>
    %90 = arith.mulf %88, %89 : vector<16x1xf32>
    %cst_44 = arith.constant 0.000000e+00 : f32
    %91 = vector.broadcast %cst_44 : f32 to vector<16x1xf32>
    %92 = arith.select %85, %90, %91 : vector<16x1xi1>, vector<16x1xf32>
    %c2_i32_45 = arith.constant 2 : i32
    %93 = tpu.dynamic_rotate %18 by %c2_i32_45 dim 0 : vector<16x32xf32>, i32 -> vector<16x32xf32>
    %c2_i32_46 = arith.constant 2 : i32
    %94 = tpu.dynamic_rotate %20 by %c2_i32_46 dim 0 : vector<16x32xf32>, i32 -> vector<16x32xf32>
    %c-2_i32 = arith.constant -2 : i32
    %95 = vector.broadcast %c-2_i32 : i32 to vector<16x1xi32>
    %96 = arith.addi %22, %95 : vector<16x1xi32>
    %c0_i32_47 = arith.constant 0 : i32
    %97 = vector.broadcast %c0_i32_47 : i32 to vector<16x1xi32>
    %98 = arith.cmpi sge, %96, %97 : vector<16x1xi32>
    %c-2_i32_48 = arith.constant -2 : i32
    %99 = vector.broadcast %c-2_i32_48 : i32 to vector<16x1xi32>
    %100 = arith.addi %22, %99 : vector<16x1xi32>
    %c8_i32_49 = arith.constant 8 : i32
    %101 = vector.broadcast %c8_i32_49 : i32 to vector<16x1xi32>
    %102 = arith.cmpi slt, %100, %101 : vector<16x1xi32>
    %103 = arith.andi %98, %102 : vector<16x1xi1>
    %104 = arith.mulf %16, %93 : vector<16x32xf32>
    %cst_50 = arith.constant dense<0.000000e+00> : vector<16xf32>
    %105 = vector.multi_reduction <add>, %104, %cst_50 [1] : vector<16x32xf32> to vector<16xf32>
    %106 = vector.shape_cast %105 : vector<16xf32> to vector<16x1xf32>
    %cst_51 = arith.constant 0.176776692 : f32
    %107 = vector.broadcast %cst_51 : f32 to vector<16x1xf32>
    %108 = arith.mulf %106, %107 : vector<16x1xf32>
    %cst_52 = arith.constant 0.000000e+00 : f32
    %109 = vector.broadcast %cst_52 : f32 to vector<16x1xf32>
    %110 = arith.select %103, %108, %109 : vector<16x1xi1>, vector<16x1xf32>
    %111 = arith.maximumf %40, %58 : vector<16x1xf32>
    %112 = arith.maximumf %111, %74 : vector<16x1xf32>
    %113 = arith.maximumf %112, %92 : vector<16x1xf32>
    %114 = arith.maximumf %113, %110 : vector<16x1xf32>
    %115 = arith.subf %40, %114 : vector<16x1xf32>
    %116 = math.exp %115 : vector<16x1xf32>
    %117 = arith.subf %58, %114 : vector<16x1xf32>
    %118 = math.exp %117 : vector<16x1xf32>
    %119 = arith.subf %74, %114 : vector<16x1xf32>
    %120 = math.exp %119 : vector<16x1xf32>
    %121 = arith.subf %92, %114 : vector<16x1xf32>
    %122 = math.exp %121 : vector<16x1xf32>
    %123 = arith.subf %110, %114 : vector<16x1xf32>
    %124 = math.exp %123 : vector<16x1xf32>
    %125 = arith.addf %116, %118 : vector<16x1xf32>
    %126 = arith.addf %125, %120 : vector<16x1xf32>
    %127 = arith.addf %126, %122 : vector<16x1xf32>
    %128 = arith.addf %127, %124 : vector<16x1xf32>
    %129 = tpu.reciprocal %128 {approx = true} : vector<16x1xf32> -> vector<16x1xf32>
    %130 = arith.mulf %116, %129 : vector<16x1xf32>
    %131 = arith.mulf %118, %129 : vector<16x1xf32>
    %132 = arith.mulf %120, %129 : vector<16x1xf32>
    %133 = arith.mulf %122, %129 : vector<16x1xf32>
    %134 = arith.mulf %124, %129 : vector<16x1xf32>
    %cst_53 = arith.constant 0.000000e+00 : f32
    %135 = vector.broadcast %cst_53 : f32 to vector<16x32xf32>
    %cst_54 = arith.constant 0.000000e+00 : f32
    %136 = vector.broadcast %cst_54 : f32 to vector<16x1xf32>
    %137 = arith.select %33, %130, %136 : vector<16x1xi1>, vector<16x1xf32>
    %138 = vector.broadcast %137 : vector<16x1xf32> to vector<16x32xf32>
    %139 = arith.mulf %138, %24 : vector<16x32xf32>
    %140 = arith.addf %135, %139 : vector<16x32xf32>
    %cst_55 = arith.constant 0.000000e+00 : f32
    %141 = vector.broadcast %cst_55 : f32 to vector<16x1xf32>
    %142 = arith.select %51, %131, %141 : vector<16x1xi1>, vector<16x1xf32>
    %143 = vector.broadcast %142 : vector<16x1xf32> to vector<16x32xf32>
    %144 = arith.mulf %143, %42 : vector<16x32xf32>
    %145 = arith.addf %140, %144 : vector<16x32xf32>
    %cst_56 = arith.constant 0.000000e+00 : f32
    %146 = vector.broadcast %cst_56 : f32 to vector<16x1xf32>
    %147 = arith.select %67, %132, %146 : vector<16x1xi1>, vector<16x1xf32>
    %148 = vector.broadcast %147 : vector<16x1xf32> to vector<16x32xf32>
    %149 = arith.mulf %148, %20 : vector<16x32xf32>
    %150 = arith.addf %145, %149 : vector<16x32xf32>
    %cst_57 = arith.constant 0.000000e+00 : f32
    %151 = vector.broadcast %cst_57 : f32 to vector<16x1xf32>
    %152 = arith.select %85, %133, %151 : vector<16x1xi1>, vector<16x1xf32>
    %153 = vector.broadcast %152 : vector<16x1xf32> to vector<16x32xf32>
    %154 = arith.mulf %153, %76 : vector<16x32xf32>
    %155 = arith.addf %150, %154 : vector<16x32xf32>
    %cst_58 = arith.constant 0.000000e+00 : f32
    %156 = vector.broadcast %cst_58 : f32 to vector<16x1xf32>
    %157 = arith.select %103, %134, %156 : vector<16x1xi1>, vector<16x1xf32>
    %158 = vector.broadcast %157 : vector<16x1xf32> to vector<16x32xf32>
    %159 = arith.mulf %158, %94 : vector<16x32xf32>
    %160 = arith.addf %155, %159 : vector<16x32xf32>
    %cst_59 = arith.constant 0.176776692 : f32
    %161 = vector.broadcast %cst_59 : f32 to vector<16x32xf32>
    %162 = arith.mulf %160, %161 : vector<16x32xf32>
    %163 = arith.truncf %162 : vector<16x32xf32> to vector<16x32xbf16>
    %c0_60 = arith.constant 0 : index
    %c0_61 = arith.constant 0 : index
    %164 = vector.load %arg8[%c0_60, %c0_61] : memref<32x128xbf16, #tpu.memory_space<vmem>>, vector<32x128xbf16>
    %cst_62 = arith.constant dense<0.000000e+00> : vector<16x128xf32>
    %165 = tpu.matmul %163, %164, %cst_62 {dimension_numbers = #tpu.dot_dimension_numbers<[1], [0], [0], [1], [0, 0, 1, 1], [], []>} : vector<16x32xbf16>, vector<32x128xbf16>, vector<16x128xf32> -> vector<16x128xf32>
    %c0_63 = arith.constant 0 : index
    %c0_64 = arith.constant 0 : index
    %166 = vector.load %arg9[%c0_63, %c0_64] : memref<1x128xf32, #tpu.memory_space<vmem>>, vector<1x128xf32>
    %167 = vector.broadcast %166 : vector<1x128xf32> to vector<16x128xf32>
    %168 = arith.addf %165, %167 : vector<16x128xf32>
    %c0_65 = arith.constant 0 : index
    %c0_66 = arith.constant 0 : index
    %169 = vector.load %arg10[%c0_65, %c0_66] : memref<16x128xf32, #tpu.memory_space<vmem>>, vector<16x128xf32>
    tpu.vector_store %arg10[%c0_65, %c0_66], %168 {strides = array<i32>} : memref<16x128xf32, #tpu.memory_space<vmem>>, vector<16x128xf32>,
    %cst_67 = arith.constant 0.000000e+00 : f32
    %170 = vector.broadcast %cst_67 : f32 to vector<16x123xf32>
    %171 = tpu.concatenate %130, %131, %132, %133, %134, %170 in 1 : vector<16x1xf32>, vector<16x1xf32>, vector<16x1xf32>, vector<16x1xf32>, vector<16x1xf32>, vector<16x123xf32> -> vector<16x128xf32>
    %c0_68 = arith.constant 0 : index
    %c0_69 = arith.constant 0 : index
    %172 = vector.load %arg11[%c0_68, %c0_69] : memref<16x128xf32, #tpu.memory_space<vmem>>, vector<16x128xf32>
    tpu.vector_store %arg11[%c0_68, %c0_69], %171 {strides = array<i32>} : memref<16x128xf32, #tpu.memory_space<vmem>>, vector<16x128xf32>,
    return
  }
  func.func @transform_0(%arg0: i32) -> (i32, i32, i32) {
    %c0_i32 = arith.constant 0 : i32
    %c0_i32_0 = arith.constant 0 : i32
    %c0_i32_1 = arith.constant 0 : i32
    return %arg0, %c0_i32, %c0_i32_0 : i32, i32, i32
  }
  func.func @transform_1(%arg0: i32) -> (i32, i32) {
    %c0_i32 = arith.constant 0 : i32
    %c0_i32_0 = arith.constant 0 : i32
    %c0_i32_1 = arith.constant 0 : i32
    return %c0_i32, %c0_i32_0 : i32, i32
  }
  func.func @transform_2(%arg0: i32) -> (i32, i32) {
    %c0_i32 = arith.constant 0 : i32
    %c0_i32_0 = arith.constant 0 : i32
    %c0_i32_1 = arith.constant 0 : i32
    return %c0_i32, %c0_i32_0 : i32, i32
  }
  func.func @transform_3(%arg0: i32) -> (i32, i32) {
    %c0_i32 = arith.constant 0 : i32
    %c0_i32_0 = arith.constant 0 : i32
    %c0_i32_1 = arith.constant 0 : i32
    return %c0_i32, %c0_i32_0 : i32, i32
  }
  func.func @transform_4(%arg0: i32) -> (i32, i32) {
    %c0_i32 = arith.constant 0 : i32
    %c0_i32_0 = arith.constant 0 : i32
    %c0_i32_1 = arith.constant 0 : i32
    return %c0_i32, %c0_i32_0 : i32, i32
  }
  func.func @transform_5(%arg0: i32) -> (i32, i32) {
    %c0_i32 = arith.constant 0 : i32
    %c0_i32_0 = arith.constant 0 : i32
    %c0_i32_1 = arith.constant 0 : i32
    return %c0_i32, %c0_i32_0 : i32, i32
  }
  func.func @transform_6(%arg0: i32) -> (i32, i32) {
    %c0_i32 = arith.constant 0 : i32
    %c0_i32_0 = arith.constant 0 : i32
    %c0_i32_1 = arith.constant 0 : i32
    return %c0_i32, %c0_i32_0 : i32, i32
  }
  func.func @transform_7(%arg0: i32) -> (i32, i32) {
    %c0_i32 = arith.constant 0 : i32
    %c0_i32_0 = arith.constant 0 : i32
    %c0_i32_1 = arith.constant 0 : i32
    return %c0_i32, %c0_i32_0 : i32, i32
  }
  func.func @transform_8(%arg0: i32) -> (i32, i32) {
    %c0_i32 = arith.constant 0 : i32
    %c0_i32_0 = arith.constant 0 : i32
    %c0_i32_1 = arith.constant 0 : i32
    return %c0_i32, %c0_i32_0 : i32, i32
  }
  func.func @transform_9(%arg0: i32) -> (i32, i32) {
    %c0_i32 = arith.constant 0 : i32
    %c0_i32_0 = arith.constant 0 : i32
    return %arg0, %c0_i32 : i32, i32
  }
  func.func @transform_10(%arg0: i32) -> (i32, i32) {
    %c0_i32 = arith.constant 0 : i32
    %c0_i32_0 = arith.constant 0 : i32
    return %arg0, %c0_i32 : i32, i32
  }
}

</mosaic_0001>

<llo_original>
// kernel: tpu_custom_call.1
$region0: #{tpu_custom_call.1}
  #allocation0 [shape = 'u32[]', space=smem, size = 0x4, offset = 0x4, fixed_abs, tag = 'smem constant byte address 0x4 - core index']
  #allocation1 [shape = 'u32[144,128]{1,0:T(1,128)}', space=vmem, size = 0x12000, scoped, tag = 'internal scratch']
  %s0 = inlined_call_operand.hbm [shape: f32[2,8,8], index: 0, kind: input, shape index: {}]
  %s1 = inlined_call_operand.hbm [shape: f32[8,8], index: 1, kind: input, shape index: {}]
  %s2 = inlined_call_operand.hbm [shape: bf16[8,32], index: 2, kind: input, shape index: {}]
  %s3 = inlined_call_operand.vmem [shape: f32[1,32], index: 3, kind: input, shape index: {}]
  %s4 = inlined_call_operand.hbm [shape: bf16[32,32], index: 4, kind: input, shape index: {}]
  %s5 = inlined_call_operand.hbm [shape: bf16[32,32], index: 5, kind: input, shape index: {}]
  %s6 = inlined_call_operand.hbm [shape: bf16[32,32], index: 6, kind: input, shape index: {}]
  %s7 = inlined_call_operand.hbm [shape: bf16[32,128], index: 7, kind: input, shape index: {}]
  %s8 = inlined_call_operand.vmem [shape: f32[1,128], index: 8, kind: input, shape index: {}]
  %s9 = inlined_call_operand.hbm [shape: f32[16,128], index: 9, kind: output, shape index: {0}]
  %s10 = inlined_call_operand.hbm [shape: f32[16,128], index: 10, kind: output, shape index: {1}]
  %11 = xla_tuple %s9, %s10
  %s12 = sld [smem:[#allocation0]]
  $region82: #{tpu_custom_call.1} parent=0
    _
  %s14 = ssub.s32 1, %s12
  %s15 = scalar_select 0, %s14, %s12
  $region1: #{tpu_custom_call.1} parent=0
    #allocation2 [shape = 'u8[8192]{0}', space=vmem, size = 0x2000, scoped, tag = 'input window, operand 0, single buffered']
    #allocation3 [shape = 's32[1]{0}', space=sflag, size = 0x4, scoped, tag = 'scoped memory for tpu_custom_call.1']
    #allocation4 [shape = 's32[1]{0}', space=sflag, size = 0x4, scoped, tag = 'scoped memory for tpu_custom_call.1']
    #allocation5 [shape = 'u8[4096]{0}', space=vmem, size = 0x1000, scoped, tag = 'input window, operand 1, single buffered']
    #allocation6 [shape = 's32[1]{0}', space=sflag, size = 0x4, scoped, tag = 'scoped memory for tpu_custom_call.1']
    #allocation7 [shape = 'u8[2048]{0}', space=vmem, size = 0x800, scoped, tag = 'input window, operand 2, single buffered']
    #allocation8 [shape = 'u8[8192]{0}', space=vmem, size = 0x2000, scoped, tag = 'input window, operand 4, single buffered']
    #allocation9 [shape = 's32[1]{0}', space=sflag, size = 0x4, scoped, tag = 'scoped memory for tpu_custom_call.1']
    #allocation10 [shape = 'u8[8192]{0}', space=vmem, size = 0x2000, scoped, tag = 'input window, operand 5, single buffered']
    #allocation11 [shape = 'u8[8192]{0}', space=vmem, size = 0x2000, scoped, tag = 'input window, operand 6, single buffered']
    #allocation12 [shape = 's32[1]{0}', space=sflag, size = 0x4, scoped, tag = 'scoped memory for tpu_custom_call.1']
    #allocation13 [shape = 'u8[8192]{0}', space=vmem, size = 0x2000, scoped, tag = 'input window, operand 7, single buffered']
    #allocation14 [shape = 'u8[8192]{0}', space=vmem, size = 0x2000, scoped, tag = 'output window, operand 0, single buffered']
    #allocation15 [shape = 'u8[8192]{0}', space=vmem, size = 0x2000, scoped, tag = 'output window, operand 1, single buffered']
    #allocation16 [shape = 's32[1]{0}', space=sflag, size = 0x4, scoped, tag = 'scoped memory for tpu_custom_call.1']
    %16 = vsyncpa [#allocation3], 0
    %17 = vsyncpa [#allocation6], 0
    %18 = vsyncpa [#allocation9], 0
    %19 = vsyncpa [#allocation12], 0
    %20 = vsyncpa [#allocation4], 0
    %21 = vsyncpa [#allocation16], 0
    // Predicated region
    $region2: #{tpu_custom_call.1} parent=1 // pred_check
      _
    $region3: #{tpu_custom_call.1} parent=1 // pred_check_branch
      %23 = sbr.rel (0) target = $region5
    $region4: #{tpu_custom_call.1} parent=1 // pred_region
      %s25 = ssub.s32 256, 256
      %26 = vsyncadd [#allocation3], %s25
      %s27 = sshll.u32 [#allocation2], 4
      %s28 = int_to_ptr.vmem [resolvable:$true] %s27
      %33 = dma.hbm_to_vmem [thread:$0]  %s0, 256, %s28, [#allocation3], 128, 128, 8
    $region5: #{tpu_custom_call.1} parent=1 // pred_fallthru
      _
    // Predicated region
    $region6: #{tpu_custom_call.1} parent=1 // pred_check
      _
    $region7: #{tpu_custom_call.1} parent=1 // pred_check_branch
      %35 = sbr.rel (0) target = $region9
    $region8: #{tpu_custom_call.1} parent=1 // pred_region
      %s37 = ssub.s32 128, 128
      %38 = vsyncadd [#allocation6], %s37
      %s40 = sshll.u32 [#allocation5], 4
      %s41 = int_to_ptr.vmem [resolvable:$true] %s40
      %43 = dma.hbm_to_vmem [thread:$0]  %s1, 128, %s41, [#allocation6]
    $region9: #{tpu_custom_call.1} parent=1 // pred_fallthru
      _
    // Predicated region
    $region10: #{tpu_custom_call.1} parent=1 // pred_check
      _
    $region11: #{tpu_custom_call.1} parent=1 // pred_check_branch
      %45 = sbr.rel (0) target = $region13
    $region12: #{tpu_custom_call.1} parent=1 // pred_region
      %s47 = ssub.s32 64, 64
      %48 = vsyncadd [#allocation6], %s47
      %s50 = sshll.u32 [#allocation7], 4
      %s51 = int_to_ptr.vmem [resolvable:$true] %s50
      %53 = dma.hbm_to_vmem [thread:$0]  %s2, 64, %s51, [#allocation6]
    $region13: #{tpu_custom_call.1} parent=1 // pred_fallthru
      _
    // Predicated region
    $region14: #{tpu_custom_call.1} parent=1 // pred_check
      _
    $region15: #{tpu_custom_call.1} parent=1 // pred_check_branch
      %55 = sbr.rel (0) target = $region17
    $region16: #{tpu_custom_call.1} parent=1 // pred_region
      _
    $region17: #{tpu_custom_call.1} parent=1 // pred_fallthru
      _
    // Predicated region
    $region18: #{tpu_custom_call.1} parent=1 // pred_check
      _
    $region19: #{tpu_custom_call.1} parent=1 // pred_check_branch
      %57 = sbr.rel (0) target = $region21
    $region20: #{tpu_custom_call.1} parent=1 // pred_region
      %s59 = ssub.s32 256, 256
      %60 = vsyncadd [#allocation9], %s59
      %s61 = sshll.u32 [#allocation8], 4
      %s62 = int_to_ptr.vmem [resolvable:$true] %s61
      %67 = dma.hbm_to_vmem [thread:$0]  %s4, 256, %s62, [#allocation9], 64, 64, 4
    $region21: #{tpu_custom_call.1} parent=1 // pred_fallthru
      _
    // Predicated region
    $region22: #{tpu_custom_call.1} parent=1 // pred_check
      _
    $region23: #{tpu_custom_call.1} parent=1 // pred_check_branch
      %69 = sbr.rel (0) target = $region25
    $region24: #{tpu_custom_call.1} parent=1 // pred_region
      %s71 = ssub.s32 256, 256
      %72 = vsyncadd [#allocation9], %s71
      %s73 = sshll.u32 [#allocation10], 4
      %s74 = int_to_ptr.vmem [resolvable:$true] %s73
      %79 = dma.hbm_to_vmem [thread:$0]  %s5, 256, %s74, [#allocation9], 64, 64, 4
    $region25: #{tpu_custom_call.1} parent=1 // pred_fallthru
      _
    // Predicated region
    $region26: #{tpu_custom_call.1} parent=1 // pred_check
      _
    $region27: #{tpu_custom_call.1} parent=1 // pred_check_branch
      %81 = sbr.rel (0) target = $region29
    $region28: #{tpu_custom_call.1} parent=1 // pred_region
      %s83 = ssub.s32 256, 256
      %84 = vsyncadd [#allocation12], %s83
      %s85 = sshll.u32 [#allocation11], 4
      %s86 = int_to_ptr.vmem [resolvable:$true] %s85
      %91 = dma.hbm_to_vmem [thread:$0]  %s6, 256, %s86, [#allocation12], 64, 64, 4
    $region29: #{tpu_custom_call.1} parent=1 // pred_fallthru
      _
    // Predicated region
    $region30: #{tpu_custom_call.1} parent=1 // pred_check
      _
    $region31: #{tpu_custom_call.1} parent=1 // pred_check_branch
      %93 = sbr.rel (0) target = $region33
    $region32: #{tpu_custom_call.1} parent=1 // pred_region
      %s95 = ssub.s32 256, 256
      %96 = vsyncadd [#allocation12], %s95
      %s97 = sshll.u32 [#allocation13], 4
      %s98 = int_to_ptr.vmem [resolvable:$true] %s97
      %103 = dma.hbm_to_vmem [thread:$0]  %s7, 256, %s98, [#allocation12], 64, 64, 4
    $region33: #{tpu_custom_call.1} parent=1 // pred_fallthru
      _
    // Predicated region
    $region34: #{tpu_custom_call.1} parent=1 // pred_check
      _
    $region35: #{tpu_custom_call.1} parent=1 // pred_check_branch
      %105 = sbr.rel (0) target = $region37
    $region36: #{tpu_custom_call.1} parent=1 // pred_region
      _
    $region37: #{tpu_custom_call.1} parent=1 // pred_fallthru
      _
    // Predicated region
    $region38: #{tpu_custom_call.1} parent=1 // pred_check
      _
    $region39: #{tpu_custom_call.1} parent=1 // pred_check_branch
      %107 = sbr.rel (0) target = $region41
    $region40: #{tpu_custom_call.1} parent=1 // pred_region
      %108 = dma.done [#allocation3], 256
    $region41: #{tpu_custom_call.1} parent=1 // pred_fallthru
      _
    // Predicated region
    $region42: #{tpu_custom_call.1} parent=1 // pred_check
      _
    $region43: #{tpu_custom_call.1} parent=1 // pred_check_branch
      %110 = sbr.rel (0) target = $region45
    $region44: #{tpu_custom_call.1} parent=1 // pred_region
      %111 = dma.done [#allocation6], 128
    $region45: #{tpu_custom_call.1} parent=1 // pred_fallthru
      _
    // Predicated region
    $region46: #{tpu_custom_call.1} parent=1 // pred_check
      _
    $region47: #{tpu_custom_call.1} parent=1 // pred_check_branch
      %113 = sbr.rel (0) target = $region49
    $region48: #{tpu_custom_call.1} parent=1 // pred_region
      %114 = dma.done [#allocation6], 64
    $region49: #{tpu_custom_call.1} parent=1 // pred_fallthru
      _
    // Predicated region
    $region50: #{tpu_custom_call.1} parent=1 // pred_check
      _
    $region51: #{tpu_custom_call.1} parent=1 // pred_check_branch
      %116 = sbr.rel (0) target = $region53
    $region52: #{tpu_custom_call.1} parent=1 // pred_region
      %117 = dma.done [#allocation9], 256
    $region53: #{tpu_custom_call.1} parent=1 // pred_fallthru
      _
    // Predicated region
    $region54: #{tpu_custom_call.1} parent=1 // pred_check
      _
    $region55: #{tpu_custom_call.1} parent=1 // pred_check_branch
      %119 = sbr.rel (0) target = $region57
    $region56: #{tpu_custom_call.1} parent=1 // pred_region
      %120 = dma.done [#allocation9], 256
    $region57: #{tpu_custom_call.1} parent=1 // pred_fallthru
      _
    // Predicated region
    $region58: #{tpu_custom_call.1} parent=1 // pred_check
      _
    $region59: #{tpu_custom_call.1} parent=1 // pred_check_branch
      %122 = sbr.rel (0) target = $region61
    $region60: #{tpu_custom_call.1} parent=1 // pred_region
      %123 = dma.done [#allocation12], 256
    $region61: #{tpu_custom_call.1} parent=1 // pred_fallthru
      _
    // Predicated region
    $region62: #{tpu_custom_call.1} parent=1 // pred_check
      _
    $region63: #{tpu_custom_call.1} parent=1 // pred_check_branch
      %125 = sbr.rel (0) target = $region65
    $region64: #{tpu_custom_call.1} parent=1 // pred_region
      %126 = dma.done [#allocation12], 256
    $region65: #{tpu_custom_call.1} parent=1 // pred_fallthru
      _
    %v128 = vld [vmem:[#allocation2] sm:$0xff]
    %v129 = vld [vmem:[#allocation2 + $0x8] sm:$0xff]
    %v130 = vld [vmem:[#allocation5] sm:$0xff]
    %v131 = vadd.f32 %v128, %v130
    %v132 = vadd.f32 %v129, %v130
    %v133 = vpack.c.bf16 %v132, %v131
    %v134 = vld [vmem:[#allocation7] sm:$0xf]
    %v135 = vld [vmem:[%s3] sm:$0x1]
    %v137 = vlaneseq
    %v138 = vshrl.u32 %v137, 7
    %v139 = vsub.s32 0, %v138
    %v140 = vrot.slane %v135, %v139
    %vm142 = vcmask 64512
    %v144 = vsel %vm142, %v133, 0
    %vm146 = vcmask 1043456
    %v148 = vsel %vm146, %v134, 0
    %150 = vmatprep.subr.bf16.mxu0 0
    %151 = vmatpush1.bf16.msra.mxu0 0
    %152 = vmatprep.subr.bf16.mxu0 0
    %153 = vmatpush1.bf16.msra.mxu0 0
    %154 = vmatprep.subr.bf16.mxu0 0
    %155 = vmatpush1.bf16.msra.mxu0 0
    %156 = vmatprep.subr.bf16.mxu0 0
    %157 = vmatpush1.bf16.msra.mxu0 0
    %158 = vmatprep.subr.bf16.mxu0 0
    %159 = vmatpush1.bf16.msra.mxu0 0
    %160 = vmatprep.subr.bf16.mxu0 0
    %161 = vmatpush1.bf16.msra.mxu0 0
    %162 = vmatprep.subr.bf16.mxu0 0
    %163 = vmatpush1.bf16.msra.mxu0 0
    %164 = vmatprep.subr.bf16.mxu0 0
    %165 = vmatpush1.bf16.msra.mxu0 %v148
    %166 = vmatprep.subr.bf16.mxu0 0
    %167 = vmatpush2.bf16.msra.mxu0 0
    %168 = vmatprep.subr.bf16.mxu0 0
    %169 = vmatpush2.bf16.msra.mxu0 0
    %170 = vmatprep.subr.bf16.mxu0 0
    %171 = vmatpush2.bf16.msra.mxu0 0
    %172 = vmatprep.subr.bf16.mxu0 0
    %173 = vmatpush2.bf16.msra.mxu0 0
    %174 = vmatprep.subr.bf16.mxu0 0
    %175 = vmatpush2.bf16.msra.mxu0 0
    %176 = vmatprep.subr.bf16.mxu0 0
    %177 = vmatpush2.bf16.msra.mxu0 0
    %178 = vmatprep.subr.bf16.mxu0 0
    %179 = vmatpush2.bf16.msra.mxu0 0
    %180 = vmatprep.subr.bf16.mxu0 0
    %181 = vmatpush2.bf16.msra.mxu0 0
    %182 = vmatprep.mubr.bf16.mxu0 0
    %183 = vmatmul.mubr.bf16.gmra.mxu0 %v144
    %v184 = vpop.f32.mrf.mxu0
    %v185 = vadd.f32 %v140, %v184
    %v186 = vpop.f32.mrf.mxu0
    %v187 = vpop.f32.mrf.mxu0
    %v188 = vadd.f32 %v140, %v187
    %v189 = vpop.f32.mrf.mxu0
    %190 = vdwg.mxu0
    %v191 = vmax.f32 %v185, 0.0
    %v192 = vmax.f32 %v188, 0.0
    %v193 = vpack.c.bf16 %v192, %v191
    %v194 = vld [vmem:[#allocation8] sm:$0xf]
    %v195 = vld [vmem:[#allocation8 + $0x4] sm:$0xf]
    %v196 = vld [vmem:[#allocation8 + $0x8] sm:$0xf]
    %v197 = vld [vmem:[#allocation8 + $0xc] sm:$0xf]
    %v202 = vunpack.c.l.b16 %v194
    %v203 = vunpack.c.l.b16 %v195
    %v204 = vunpack.c.l.b16 %v196
    %v205 = vunpack.c.l.b16 %v197
    %v206 = vpack.c.b16 %v203, %v202
    %v207 = vpack.c.b16 %v205, %v204
    %vm210 = vcmask 261120
    %v212 = vsel %vm210, %v193, 0
    %214 = vmatprep.subr.bf16.mxu0 0
    %215 = vmatpush1.bf16.msra.mxu0 0
    %216 = vmatprep.subr.bf16.mxu0 0
    %217 = vmatpush1.bf16.msra.mxu0 0
    %218 = vmatprep.subr.bf16.mxu0 0
    %219 = vmatpush1.bf16.msra.mxu0 0
    %220 = vmatprep.subr.bf16.mxu0 0
    %221 = vmatpush1.bf16.msra.mxu0 0
    %222 = vmatprep.subr.bf16.mxu0 0
    %223 = vmatpush1.bf16.msra.mxu0 0
    %224 = vmatprep.subr.bf16.mxu0 0
    %225 = vmatpush1.bf16.msra.mxu0 0
    %226 = vmatprep.subr.bf16.mxu0 0
    %227 = vmatpush1.bf16.msra.mxu0 %v207
    %228 = vmatprep.subr.bf16.mxu0 0
    %229 = vmatpush1.bf16.msra.mxu0 %v206
    %230 = vmatprep.subr.bf16.mxu0 0
    %231 = vmatpush2.bf16.msra.mxu0 0
    %232 = vmatprep.subr.bf16.mxu0 0
    %233 = vmatpush2.bf16.msra.mxu0 0
    %234 = vmatprep.subr.bf16.mxu0 0
    %235 = vmatpush2.bf16.msra.mxu0 0
    %236 = vmatprep.subr.bf16.mxu0 0
    %237 = vmatpush2.bf16.msra.mxu0 0
    %238 = vmatprep.subr.bf16.mxu0 0
    %239 = vmatpush2.bf16.msra.mxu0 0
    %240 = vmatprep.subr.bf16.mxu0 0
    %241 = vmatpush2.bf16.msra.mxu0 0
    %242 = vmatprep.subr.bf16.mxu0 0
    %243 = vmatpush2.bf16.msra.mxu0 0
    %244 = vmatprep.subr.bf16.mxu0 0
    %245 = vmatpush2.bf16.msra.mxu0 0
    %246 = vmatprep.mubr.bf16.mxu0 0
    %247 = vmatmul.mubr.bf16.gmra.mxu0 %v212
    %v248 = vpop.f32.mrf.mxu0
    %v249 = vadd.f32 0.0, %v248
    %v250 = vpop.f32.mrf.mxu0
    %v251 = vpop.f32.mrf.mxu0
    %v252 = vadd.f32 0.0, %v251
    %v253 = vpop.f32.mrf.mxu0
    %254 = vdwg.mxu0
    %v255 = vld [vmem:[#allocation10] sm:$0xf]
    %v256 = vld [vmem:[#allocation10 + $0x4] sm:$0xf]
    %v257 = vld [vmem:[#allocation10 + $0x8] sm:$0xf]
    %v258 = vld [vmem:[#allocation10 + $0xc] sm:$0xf]
    %v263 = vunpack.c.l.b16 %v255
    %v264 = vunpack.c.l.b16 %v256
    %v265 = vunpack.c.l.b16 %v257
    %v266 = vunpack.c.l.b16 %v258
    %v267 = vpack.c.b16 %v264, %v263
    %v268 = vpack.c.b16 %v266, %v265
    %271 = vmatprep.subr.bf16.mxu0 0
    %272 = vmatpush1.bf16.msra.mxu0 0
    %273 = vmatprep.subr.bf16.mxu0 0
    %274 = vmatpush1.bf16.msra.mxu0 0
    %275 = vmatprep.subr.bf16.mxu0 0
    %276 = vmatpush1.bf16.msra.mxu0 0
    %277 = vmatprep.subr.bf16.mxu0 0
    %278 = vmatpush1.bf16.msra.mxu0 0
    %279 = vmatprep.subr.bf16.mxu0 0
    %280 = vmatpush1.bf16.msra.mxu0 0
    %281 = vmatprep.subr.bf16.mxu0 0
    %282 = vmatpush1.bf16.msra.mxu0 0
    %283 = vmatprep.subr.bf16.mxu0 0
    %284 = vmatpush1.bf16.msra.mxu0 %v268
    %285 = vmatprep.subr.bf16.mxu0 0
    %286 = vmatpush1.bf16.msra.mxu0 %v267
    %287 = vmatprep.subr.bf16.mxu0 0
    %288 = vmatpush2.bf16.msra.mxu0 0
    %289 = vmatprep.subr.bf16.mxu0 0
    %290 = vmatpush2.bf16.msra.mxu0 0
    %291 = vmatprep.subr.bf16.mxu0 0
    %292 = vmatpush2.bf16.msra.mxu0 0
    %293 = vmatprep.subr.bf16.mxu0 0
    %294 = vmatpush2.bf16.msra.mxu0 0
    %295 = vmatprep.subr.bf16.mxu0 0
    %296 = vmatpush2.bf16.msra.mxu0 0
    %297 = vmatprep.subr.bf16.mxu0 0
    %298 = vmatpush2.bf16.msra.mxu0 0
    %299 = vmatprep.subr.bf16.mxu0 0
    %300 = vmatpush2.bf16.msra.mxu0 0
    %301 = vmatprep.subr.bf16.mxu0 0
    %302 = vmatpush2.bf16.msra.mxu0 0
    %303 = vmatprep.mubr.bf16.mxu0 0
    %304 = vmatmul.mubr.bf16.gmra.mxu0 %v212
    %v305 = vpop.f32.mrf.mxu0
    %v306 = vadd.f32 0.0, %v305
    %v307 = vpop.f32.mrf.mxu0
    %v308 = vpop.f32.mrf.mxu0
    %v309 = vadd.f32 0.0, %v308
    %v310 = vpop.f32.mrf.mxu0
    %311 = vdwg.mxu0
    %v312 = vld [vmem:[#allocation11] sm:$0xf]
    %v313 = vld [vmem:[#allocation11 + $0x4] sm:$0xf]
    %v314 = vld [vmem:[#allocation11 + $0x8] sm:$0xf]
    %v315 = vld [vmem:[#allocation11 + $0xc] sm:$0xf]
    %v320 = vunpack.c.l.b16 %v312
    %v321 = vunpack.c.l.b16 %v313
    %v322 = vunpack.c.l.b16 %v314
    %v323 = vunpack.c.l.b16 %v315
    %v324 = vpack.c.b16 %v321, %v320
    %v325 = vpack.c.b16 %v323, %v322
    %328 = vmatprep.subr.bf16.mxu0 0
    %329 = vmatpush1.bf16.msra.mxu0 0
    %330 = vmatprep.subr.bf16.mxu0 0
    %331 = vmatpush1.bf16.msra.mxu0 0
    %332 = vmatprep.subr.bf16.mxu0 0
    %333 = vmatpush1.bf16.msra.mxu0 0
    %334 = vmatprep.subr.bf16.mxu0 0
    %335 = vmatpush1.bf16.msra.mxu0 0
    %336 = vmatprep.subr.bf16.mxu0 0
    %337 = vmatpush1.bf16.msra.mxu0 0
    %338 = vmatprep.subr.bf16.mxu0 0
    %339 = vmatpush1.bf16.msra.mxu0 0
    %340 = vmatprep.subr.bf16.mxu0 0
    %341 = vmatpush1.bf16.msra.mxu0 %v325
    %342 = vmatprep.subr.bf16.mxu0 0
    %343 = vmatpush1.bf16.msra.mxu0 %v324
    %344 = vmatprep.subr.bf16.mxu0 0
    %345 = vmatpush2.bf16.msra.mxu0 0
    %346 = vmatprep.subr.bf16.mxu0 0
    %347 = vmatpush2.bf16.msra.mxu0 0
    %348 = vmatprep.subr.bf16.mxu0 0
    %349 = vmatpush2.bf16.msra.mxu0 0
    %350 = vmatprep.subr.bf16.mxu0 0
    %351 = vmatpush2.bf16.msra.mxu0 0
    %352 = vmatprep.subr.bf16.mxu0 0
    %353 = vmatpush2.bf16.msra.mxu0 0
    %354 = vmatprep.subr.bf16.mxu0 0
    %355 = vmatpush2.bf16.msra.mxu0 0
    %356 = vmatprep.subr.bf16.mxu0 0
    %357 = vmatpush2.bf16.msra.mxu0 0
    %358 = vmatprep.subr.bf16.mxu0 0
    %359 = vmatpush2.bf16.msra.mxu0 0
    %360 = vmatprep.mubr.bf16.mxu0 0
    %361 = vmatmul.mubr.bf16.gmra.mxu0 %v212
    %v362 = vpop.f32.mrf.mxu0
    %v363 = vadd.f32 0.0, %v362
    %v364 = vpop.f32.mrf.mxu0
    %v365 = vpop.f32.mrf.mxu0
    %v366 = vadd.f32 0.0, %v365
    %v367 = vpop.f32.mrf.mxu0
    %368 = vdwg.mxu0
    %v369 = vlaneseq
    %v370 = vshrl.u32 %v369, 7
    %v371 = vrot.slane %v306, 2
    %v372 = vrot.slane %v309, 2
    %vm373 = vcmp.lt.s32.totalorder %v370, 6
    %v374 = vsel %vm373, %v371, %v372
    %v375 = vsel %vm373, %v372, %v371
    %v376 = vrot.slane %v363, 2
    %v377 = vrot.slane %v366, 2
    %v378 = vsel %vm373, %v376, %v377
    %v379 = vsel %vm373, %v377, %v376
    %v380 = vadd.s32 %v370, 2
    %vm381 = vcmp.ge.s32.totalorder %v380, 0
    %vm382 = vcmp.lt.s32.totalorder %v380, 8
    %vm383 = vmand %vm381, %vm382
    %v384 = vmul.f32 %v249, %v374
    %v385 = vmul.f32 %v252, %v375
    %v386 = vsel %vm210, %v384, 0.0
    %387 = vadd.xlane.f32.xlu0 %v386
    %v388 = vpop.xlane.xlu0 %387
    %v389 = vsel %vm210, %v385, 0.0
    %390 = vadd.xlane.f32.xlu0 %v389
    %v391 = vpop.xlane.xlu0 %390
    %v392 = vmul.f32 %v388, 0.17677669
    %v393 = vmul.f32 %v391, 0.17677669
    %v394 = vsel %vm383, %v392, 0.0
    %v395 = vsel %vm383, %v393, 0.0
    %v396 = vrot.slane %v306, 1
    %v397 = vrot.slane %v309, 1
    %vm398 = vcmp.lt.s32.totalorder %v370, 7
    %v399 = vsel %vm398, %v396, %v397
    %v400 = vsel %vm398, %v397, %v396
    %v401 = vrot.slane %v363, 1
    %v402 = vrot.slane %v366, 1
    %v403 = vsel %vm398, %v401, %v402
    %v404 = vsel %vm398, %v402, %v401
    %v405 = vadd.s32 %v370, 1
    %vm406 = vcmp.ge.s32.totalorder %v405, 0
    %vm407 = vcmp.lt.s32.totalorder %v405, 8
    %vm408 = vmand %vm406, %vm407
    %v409 = vmul.f32 %v249, %v399
    %v410 = vmul.f32 %v252, %v400
    %v411 = vsel %vm210, %v409, 0.0
    %412 = vadd.xlane.f32.xlu0 %v411
    %v413 = vpop.xlane.xlu0 %412
    %v414 = vsel %vm210, %v410, 0.0
    %415 = vadd.xlane.f32.xlu0 %v414
    %v416 = vpop.xlane.xlu0 %415
    %v417 = vmul.f32 %v413, 0.17677669
    %v418 = vmul.f32 %v416, 0.17677669
    %v419 = vsel %vm408, %v417, 0.0
    %v420 = vsel %vm408, %v418, 0.0
    %vm421 = vcmp.ge.s32.totalorder %v370, 0
    %vm422 = vcmp.lt.s32.totalorder %v370, 8
    %vm423 = vmand %vm421, %vm422
    %v424 = vmul.f32 %v249, %v306
    %v425 = vmul.f32 %v252, %v309
    %v426 = vsel %vm210, %v424, 0.0
    %427 = vadd.xlane.f32.xlu0 %v426
    %v428 = vpop.xlane.xlu0 %427
    %v429 = vsel %vm210, %v425, 0.0
    %430 = vadd.xlane.f32.xlu0 %v429
    %v431 = vpop.xlane.xlu0 %430
    %v432 = vmul.f32 %v428, 0.17677669
    %v433 = vmul.f32 %v431, 0.17677669
    %v434 = vsel %vm423, %v432, 0.0
    %v435 = vsel %vm423, %v433, 0.0
    %v436 = vrot.slane %v306, 7
    %v437 = vrot.slane %v309, 7
    %vm438 = vcmp.lt.s32.totalorder %v370, 1
    %v439 = vsel %vm438, %v436, %v437
    %v440 = vsel %vm438, %v437, %v436
    %v441 = vrot.slane %v363, 7
    %v442 = vrot.slane %v366, 7
    %v443 = vsel %vm438, %v441, %v442
    %v444 = vsel %vm438, %v442, %v441
    %v445 = vadd.s32 %v370, 4294967295
    %vm446 = vcmp.ge.s32.totalorder %v445, 0
    %vm447 = vcmp.lt.s32.totalorder %v445, 8
    %vm448 = vmand %vm446, %vm447
    %v449 = vmul.f32 %v249, %v440
    %v450 = vmul.f32 %v252, %v439
    %v451 = vsel %vm210, %v449, 0.0
    %452 = vadd.xlane.f32.xlu0 %v451
    %v453 = vpop.xlane.xlu0 %452
    %v454 = vsel %vm210, %v450, 0.0
    %455 = vadd.xlane.f32.xlu0 %v454
    %v456 = vpop.xlane.xlu0 %455
    %v457 = vmul.f32 %v453, 0.17677669
    %v458 = vmul.f32 %v456, 0.17677669
    %v459 = vsel %vm448, %v457, 0.0
    %v460 = vsel %vm448, %v458, 0.0
    %v461 = vrot.slane %v306, 6
    %v462 = vrot.slane %v309, 6
    %vm463 = vcmp.lt.s32.totalorder %v370, 2
    %v464 = vsel %vm463, %v461, %v462
    %v465 = vsel %vm463, %v462, %v461
    %v466 = vrot.slane %v363, 6
    %v467 = vrot.slane %v366, 6
    %v468 = vsel %vm463, %v466, %v467
    %v469 = vsel %vm463, %v467, %v466
    %v470 = vadd.s32 %v370, 4294967294
    %vm471 = vcmp.ge.s32.totalorder %v470, 0
    %vm472 = vcmp.lt.s32.totalorder %v470, 8
    %vm473 = vmand %vm471, %vm472
    %v474 = vmul.f32 %v249, %v465
    %v475 = vmul.f32 %v252, %v464
    %v476 = vsel %vm210, %v474, 0.0
    %477 = vadd.xlane.f32.xlu0 %v476
    %v478 = vpop.xlane.xlu0 %477
    %v479 = vsel %vm210, %v475, 0.0
    %480 = vadd.xlane.f32.xlu0 %v479
    %v481 = vpop.xlane.xlu0 %480
    %v482 = vmul.f32 %v478, 0.17677669
    %v483 = vmul.f32 %v481, 0.17677669
    %v484 = vsel %vm473, %v482, 0.0
    %v485 = vsel %vm473, %v483, 0.0
    %v486 = vmax.f32 %v394, %v419
    %v487 = vmax.f32 %v395, %v420
    %v488 = vmax.f32 %v486, %v434
    %v489 = vmax.f32 %v487, %v435
    %v490 = vmax.f32 %v488, %v459
    %v491 = vmax.f32 %v489, %v460
    %v492 = vmax.f32 %v490, %v484
    %v493 = vmax.f32 %v491, %v485
    %v494 = vsub.f32 %v394, %v492
    %v495 = vsub.f32 %v395, %v493
    %v496 = vmul.f32 %v494, 1.442695
    %v497 = vpow.pop %v496
    %v498 = vmul.f32 %v495, 1.442695
    %v499 = vpow.pop %v498
    %v500 = vsub.f32 %v419, %v492
    %v501 = vsub.f32 %v420, %v493
    %v502 = vmul.f32 %v500, 1.442695
    %v503 = vpow.pop %v502
    %v504 = vmul.f32 %v501, 1.442695
    %v505 = vpow.pop %v504
    %v506 = vsub.f32 %v434, %v492
    %v507 = vsub.f32 %v435, %v493
    %v508 = vmul.f32 %v506, 1.442695
    %v509 = vpow.pop %v508
    %v510 = vmul.f32 %v507, 1.442695
    %v511 = vpow.pop %v510
    %v512 = vsub.f32 %v459, %v492
    %v513 = vsub.f32 %v460, %v493
    %v514 = vmul.f32 %v512, 1.442695
    %v515 = vpow.pop %v514
    %v516 = vmul.f32 %v513, 1.442695
    %v517 = vpow.pop %v516
    %v518 = vsub.f32 %v484, %v492
    %v519 = vsub.f32 %v485, %v493
    %v520 = vmul.f32 %v518, 1.442695
    %v521 = vpow.pop %v520
    %v522 = vmul.f32 %v519, 1.442695
    %v523 = vpow.pop %v522
    %v524 = vadd.f32 %v497, %v503
    %v525 = vadd.f32 %v499, %v505
    %v526 = vadd.f32 %v524, %v509
    %v527 = vadd.f32 %v525, %v511
    %v528 = vadd.f32 %v526, %v515
    %v529 = vadd.f32 %v527, %v517
    %v530 = vadd.f32 %v528, %v521
    %v531 = vadd.f32 %v529, %v523
    %v532 = vrcp.pop %v530
    %v533 = vrcp.pop %v531
    %v534 = vmul.f32 %v497, %v532
    %v535 = vmul.f32 %v499, %v533
    %v536 = vmul.f32 %v503, %v532
    %v537 = vmul.f32 %v505, %v533
    %v538 = vmul.f32 %v509, %v532
    %v539 = vmul.f32 %v511, %v533
    %v540 = vmul.f32 %v515, %v532
    %v541 = vmul.f32 %v517, %v533
    %v542 = vmul.f32 %v521, %v532
    %v543 = vmul.f32 %v523, %v533
    %v544 = vsel %vm383, %v534, 0.0
    %v545 = vsel %vm383, %v535, 0.0
    %v546 = vmul.f32 %v544, %v378
    %v547 = vmul.f32 %v545, %v379
    %v548 = vadd.f32 %v546, 0.0
    %v549 = vadd.f32 %v547, 0.0
    %v550 = vsel %vm408, %v536, 0.0
    %v551 = vsel %vm408, %v537, 0.0
    %v552 = vmul.f32 %v550, %v403
    %v553 = vmul.f32 %v551, %v404
    %v554 = vadd.f32 %v548, %v552
    %v555 = vadd.f32 %v549, %v553
    %v556 = vsel %vm423, %v538, 0.0
    %v557 = vsel %vm423, %v539, 0.0
    %v558 = vmul.f32 %v556, %v363
    %v559 = vmul.f32 %v557, %v366
    %v560 = vadd.f32 %v554, %v558
    %v561 = vadd.f32 %v555, %v559
    %v562 = vsel %vm448, %v540, 0.0
    %v563 = vsel %vm448, %v541, 0.0
    %v564 = vmul.f32 %v562, %v444
    %v565 = vmul.f32 %v563, %v443
    %v566 = vadd.f32 %v560, %v564
    %v567 = vadd.f32 %v561, %v565
    %v568 = vsel %vm473, %v542, 0.0
    %v569 = vsel %vm473, %v543, 0.0
    %v570 = vmul.f32 %v568, %v469
    %v571 = vmul.f32 %v569, %v468
    %v572 = vadd.f32 %v566, %v570
    %v573 = vadd.f32 %v567, %v571
    %v574 = vmul.f32 %v572, 0.17677669
    %v575 = vmul.f32 %v573, 0.17677669
    %v576 = vpack.c.bf16 %v575, %v574
    %v577 = vld [vmem:[#allocation13] sm:$0xf]
    %v578 = vld [vmem:[#allocation13 + $0x4] sm:$0xf]
    %v579 = vld [vmem:[#allocation13 + $0x8] sm:$0xf]
    %v580 = vld [vmem:[#allocation13 + $0xc] sm:$0xf]
    %v581 = vld [vmem:[%s8] sm:$0x1]
    %v583 = vlaneseq
    %v584 = vshrl.u32 %v583, 7
    %v585 = vsub.s32 0, %v584
    %v586 = vrot.slane %v581, %v585
    %v592 = vunpack.c.l.b16 %v577
    %v593 = vunpack.c.l.b16 %v578
    %v594 = vunpack.c.l.b16 %v579
    %v595 = vunpack.c.l.b16 %v580
    %v596 = vpack.c.b16 %v593, %v592
    %v597 = vpack.c.b16 %v595, %v594
    %v601 = vsel %vm210, %v576, 0
    %603 = vmatprep.subr.bf16.mxu0 0
    %604 = vmatpush1.bf16.msra.mxu0 0
    %605 = vmatprep.subr.bf16.mxu0 0
    %606 = vmatpush1.bf16.msra.mxu0 0
    %607 = vmatprep.subr.bf16.mxu0 0
    %608 = vmatpush1.bf16.msra.mxu0 0
    %609 = vmatprep.subr.bf16.mxu0 0
    %610 = vmatpush1.bf16.msra.mxu0 0
    %611 = vmatprep.subr.bf16.mxu0 0
    %612 = vmatpush1.bf16.msra.mxu0 0
    %613 = vmatprep.subr.bf16.mxu0 0
    %614 = vmatpush1.bf16.msra.mxu0 0
    %615 = vmatprep.subr.bf16.mxu0 0
    %616 = vmatpush1.bf16.msra.mxu0 %v597
    %617 = vmatprep.subr.bf16.mxu0 0
    %618 = vmatpush1.bf16.msra.mxu0 %v596
    %619 = vmatprep.subr.bf16.mxu0 0
    %620 = vmatpush2.bf16.msra.mxu0 0
    %621 = vmatprep.subr.bf16.mxu0 0
    %622 = vmatpush2.bf16.msra.mxu0 0
    %623 = vmatprep.subr.bf16.mxu0 0
    %624 = vmatpush2.bf16.msra.mxu0 0
    %625 = vmatprep.subr.bf16.mxu0 0
    %626 = vmatpush2.bf16.msra.mxu0 0
    %627 = vmatprep.subr.bf16.mxu0 0
    %628 = vmatpush2.bf16.msra.mxu0 0
    %629 = vmatprep.subr.bf16.mxu0 0
    %630 = vmatpush2.bf16.msra.mxu0 0
    %631 = vmatprep.subr.bf16.mxu0 0
    %632 = vmatpush2.bf16.msra.mxu0 0
    %633 = vmatprep.subr.bf16.mxu0 0
    %634 = vmatpush2.bf16.msra.mxu0 0
    %635 = vmatprep.mubr.bf16.mxu0 0
    %636 = vmatmul.mubr.bf16.gmra.mxu0 %v601
    %v637 = vpop.f32.mrf.mxu0
    %v638 = vadd.f32 %v586, %v637
    %v639 = vpop.f32.mrf.mxu0
    %v640 = vpop.f32.mrf.mxu0
    %v641 = vadd.f32 %v586, %v640
    %v642 = vpop.f32.mrf.mxu0
    %643 = vdwg.mxu0
    %644 = vst [vmem:[#allocation14] sm:$0xff] %v638
    %645 = vst [vmem:[#allocation14 + $0x8] sm:$0xff] %v641
    %vm646 = vcmask 7168
    %v647 = vsel %vm646, %v534, %v536
    %v648 = vsel %vm646, %v535, %v537
    %vm649 = vcmask 15360
    %v650 = vsel %vm649, %v647, %v538
    %v651 = vsel %vm649, %v648, %v539
    %vm652 = vcmask 23552
    %v653 = vsel %vm652, %v650, %v540
    %v654 = vsel %vm652, %v651, %v541
    %vm655 = vcmask 31744
    %v656 = vsel %vm655, %v653, %v542
    %v657 = vsel %vm655, %v654, %v543
    %vm658 = vcmask 39936
    %v659 = vsel %vm658, %v656, 0.0
    %v660 = vsel %vm658, %v657, 0.0
    %661 = vst [vmem:[#allocation15] sm:$0xff] %v659
    %662 = vst [vmem:[#allocation15 + $0x8] sm:$0xff] %v660
    // Predicated region
    $region66: #{tpu_custom_call.1} parent=1 // pred_check
      _
    $region67: #{tpu_custom_call.1} parent=1 // pred_check_branch
      %664 = sbr.rel (0) target = $region69
    $region68: #{tpu_custom_call.1} parent=1 // pred_region
      %s666 = ssub.s32 256, 256
      %667 = vsyncadd [#allocation4], %s666
      %s668 = sshll.u32 [#allocation14], 4
      %s669 = int_to_ptr.vmem [resolvable:$true] %s668
      %674 = dma.vmem_to_hbm [thread:$0]  %s669, 256, %s9, [#allocation4], 128, 128, 8
    $region69: #{tpu_custom_call.1} parent=1 // pred_fallthru
      _
    // Predicated region
    $region70: #{tpu_custom_call.1} parent=1 // pred_check
      _
    $region71: #{tpu_custom_call.1} parent=1 // pred_check_branch
      %676 = sbr.rel (0) target = $region73
    $region72: #{tpu_custom_call.1} parent=1 // pred_region
      %s678 = ssub.s32 256, 256
      %679 = vsyncadd [#allocation16], %s678
      %s680 = sshll.u32 [#allocation15], 4
      %s681 = int_to_ptr.vmem [resolvable:$true] %s680
      %686 = dma.vmem_to_hbm [thread:$0]  %s681, 256, %s10, [#allocation16], 128, 128, 8
    $region73: #{tpu_custom_call.1} parent=1 // pred_fallthru
      _
    // Predicated region
    $region74: #{tpu_custom_call.1} parent=1 // pred_check
      _
    $region75: #{tpu_custom_call.1} parent=1 // pred_check_branch
      %688 = sbr.rel (0) target = $region77
    $region76: #{tpu_custom_call.1} parent=1 // pred_region
      %689 = dma.done [#allocation4], 256
    $region77: #{tpu_custom_call.1} parent=1 // pred_fallthru
      _
    // Predicated region
    $region78: #{tpu_custom_call.1} parent=1 // pred_check
      _
    $region79: #{tpu_custom_call.1} parent=1 // pred_check_branch
      %691 = sbr.rel (0) target = $region81
    $region80: #{tpu_custom_call.1} parent=1 // pred_region
      %692 = dma.done [#allocation16], 256
    $region81: #{tpu_custom_call.1} parent=1 // pred_fallthru
      _
    %693 = vsyncpa [#allocation3], 1
    %694 = vsyncpa [#allocation6], 1
    %695 = vsyncpa [#allocation9], 1
    %696 = vsyncpa [#allocation12], 1
    %697 = vsyncpa [#allocation4], 1
    %698 = vsyncpa [#allocation16], 1

</llo_original>
